<compile_context>
chip_gen: v5e
topology: v5e:2x2
jax: 0.10.0
libtpu: 0.0.40
codegen_flags: <defaults>
</compile_context>

<pallas_src>
import functools

import jax
import jax.numpy as jnp
from jax.experimental import pallas as pl
from jax.experimental.pallas import tpu as pltpu


def _autoencoder_kernel(x_ref,
                        w1_ref, b1_ref,
                        w2_ref, b2_ref,
                        w3_ref, b3_ref,
                        w4_ref, b4_ref,
                        out_ref,
                        *, compute_dtype):
    """One batch tile of the fused forward pass (all layers VMEM-resident)."""
    x = x_ref[...]

    def linear(h, w_ref, b_ref):
        # w_ref holds W^T with shape (in, out); b_ref is (1, out) for 2-D broadcast.
        return (jnp.dot(h.astype(compute_dtype),
                        w_ref[...].astype(compute_dtype),
                        preferred_element_type=jnp.float32)
                + b_ref[...].astype(jnp.float32))

    def sigmoid(v):
        # exp goes to the EUP slot; exact reciprocal keeps 1e-5 agreement with
        # jax.nn.sigmoid (approx=True would be cheaper but below test tolerance).
        return pl.reciprocal(1.0 + jnp.exp(-v))

    relu = lambda v: jnp.maximum(v, 0.0)

    # encoder
    h = sigmoid(linear(x, w1_ref, b1_ref))   # Linear(32,16) -> Sigmoid
    h = relu(linear(h, w2_ref, b2_ref))      # Linear(16,8)  -> ReLU
    # decoder
    h = relu(linear(h, w3_ref, b3_ref))      # Linear(8,16)  -> ReLU
    h = sigmoid(linear(h, w4_ref, b4_ref))   # Linear(16,32) -> Sigmoid

    out_ref[...] = h.astype(out_ref.dtype)


def pack_params(params):
    """One-time glue (do at parameter-load time, NOT per call):
    PyTorch (out,in) W / (out,) b  ->  (in,out) W^T / (1,out) b."""
    packed = []
    for w, b in params:
        packed.append((jnp.asarray(w, jnp.float32).T,
                       jnp.asarray(b, jnp.float32).reshape(1, -1)))
    return packed


def simple_autoencoder_forward(x, packed_params, *, block_rows=4096,
                               compute_dtype=jnp.float32):
    """x: (N, d_in) float32. packed_params: output of pack_params(...)."""
    assert len(packed_params) == 4
    n, d_in = x.shape
    d_out = packed_params[-1][0].shape[1]

    # Batch tile: multiple of 8 sublanes, capped so double-buffered in/out blocks
    # stay tiny relative to scoped VMEM on every chip (v5e/v6e/v7x).
    block_rows = max(8, -(-block_rows // 8) * 8)
    n_rounded = -(-n // 8) * 8
    tb = min(block_rows, n_rounded)
    n_pad = -(-n // tb) * tb
    if n_pad != n:
        x = jnp.pad(x, ((0, n_pad - n), (0, 0)))

    grid = (n_pad // tb,)

    const_map = lambda i: (0, 0)
    batch_map = lambda i: (i, 0)

    flat_args = [x]
    in_specs = [pl.BlockSpec((tb, d_in), batch_map)]
    for w_t, b2 in packed_params:
        flat_args += [w_t, b2]
        in_specs += [pl.BlockSpec(w_t.shape, const_map),
                     pl.BlockSpec(b2.shape, const_map)]

    out_spec = pl.BlockSpec((tb, d_out), batch_map)

    fn = pl.pallas_call(
        functools.partial(_autoencoder_kernel, compute_dtype=compute_dtype),
        out_shape=jax.ShapeDtypeStruct((n_pad, d_out), jnp.float32),
        grid=grid,
        in_specs=in_specs,
        out_specs=out_spec,
        compiler_params=pltpu.CompilerParams(
            dimension_semantics=("parallel",)),  # independent batch tiles; 2x on v7x
    )
    out = fn(*flat_args)
    if n_pad != n:
        out = out[:n]
    return out


def init_params(key, layer_dims):
    """Deterministic init mimicking nn.Linear's default U(-1/sqrt(fan_in), ...),
    with the same per-layer (in, out) sequence the PyTorch module builds."""
    n = len(layer_dims)
    enc_dims = layer_dims[:n // 2 + 1]
    dec_dims = layer_dims[n // 2:]
    pairs = ([(enc_dims[i - 1], enc_dims[i]) for i in range(1, len(enc_dims))] +
             [(dec_dims[i - 1], dec_dims[i]) for i in range(1, len(dec_dims))])
    params = []
    for (fan_in, fan_out) in pairs:
        key, kw, kb = jax.random.split(key, 3)
        bound = 1.0 / jnp.sqrt(fan_in)
        w = jax.random.uniform(kw, (fan_out, fan_in), jnp.float32, -bound, bound)
        b = jax.random.uniform(kb, (fan_out,), jnp.float32, -bound, bound)
        params.append((w, b))
    return params


def reference_forward(x, params):
    h = x
    acts = [jax.nn.sigmoid, lambda v: jnp.maximum(v, 0.0),
            lambda v: jnp.maximum(v, 0.0), jax.nn.sigmoid]
    for (w, b), act in zip(params, acts):
        h = act(h @ w.T + b)
    return h


if __name__ == "__main__":
    layer_dims = [32, 16, 8, 16, 32]

    key = jax.random.PRNGKey(0)
    key, kx1, kx2 = jax.random.split(key, 3)
    params = init_params(key, layer_dims)
    packed = pack_params(params)  # one-time weight transpose / bias reshape

    # Case 1: small batch, single tile.
    batch = 8
    x = jax.random.normal(kx1, (batch, layer_dims[0]), jnp.float32)
    out = jax.block_until_ready(simple_autoencoder_forward(x, packed))
    ref = reference_forward(x, params)
    assert out.shape == (batch, layer_dims[-1])
    assert jnp.allclose(out, ref, atol=1e-5, rtol=1e-5)

    # Case 2: non-divisible batch with a tiny tile to exercise the pipelined,
    # multi-step grid and the padding / tail-slice path.
    batch2 = 19
    x2 = jax.random.normal(kx2, (batch2, layer_dims[0]), jnp.float32)
    out2 = jax.block_until_ready(
        simple_autoencoder_forward(x2, packed, block_rows=8))
    ref2 = reference_forward(x2, params)
    assert out2.shape == (batch2, layer_dims[-1])
    assert jnp.allclose(out2, ref2, atol=1e-5, rtol=1e-5)

    print("KERNEL_OK")
</pallas_src>

<mosaic_0001>
module attributes {stable_mosaic.version = 11 : i64} {
  func.func @_autoencoder_kernel(%arg0: i32, %arg1: memref<8x32xf32, #tpu.memory_space<vmem>>, %arg2: memref<32x16xf32, #tpu.memory_space<vmem>>, %arg3: memref<1x16xf32, #tpu.memory_space<vmem>>, %arg4: memref<16x8xf32, #tpu.memory_space<vmem>>, %arg5: memref<1x8xf32, #tpu.memory_space<vmem>>, %arg6: memref<8x16xf32, #tpu.memory_space<vmem>>, %arg7: memref<1x16xf32, #tpu.memory_space<vmem>>, %arg8: memref<16x32xf32, #tpu.memory_space<vmem>>, %arg9: memref<1x32xf32, #tpu.memory_space<vmem>>, %arg10: memref<8x32xf32, #tpu.memory_space<vmem>>) attributes {dimension_semantics = [#tpu.dimension_semantics<parallel>], iteration_bounds = array<i64: 1>, scalar_prefetch = 0 : i64, scratch_operands = 0 : i64, tpu.core_type = #tpu.core_type<tc>, window_params = [{transform_indices = @transform_0, window_bounds = array<i64: 8, 32>}, {pipeline_mode = #tpu.pipeline_mode<synchronous>, transform_indices = @transform_1, window_bounds = array<i64: 32, 16>}, {pipeline_mode = #tpu.pipeline_mode<synchronous>, transform_indices = @transform_2, window_bounds = array<i64: 1, 16>}, {pipeline_mode = #tpu.pipeline_mode<synchronous>, transform_indices = @transform_3, window_bounds = array<i64: 16, 8>}, {pipeline_mode = #tpu.pipeline_mode<synchronous>, transform_indices = @transform_4, window_bounds = array<i64: 1, 8>}, {pipeline_mode = #tpu.pipeline_mode<synchronous>, transform_indices = @transform_5, window_bounds = array<i64: 8, 16>}, {pipeline_mode = #tpu.pipeline_mode<synchronous>, transform_indices = @transform_6, window_bounds = array<i64: 1, 16>}, {pipeline_mode = #tpu.pipeline_mode<synchronous>, transform_indices = @transform_7, window_bounds = array<i64: 16, 32>}, {pipeline_mode = #tpu.pipeline_mode<synchronous>, transform_indices = @transform_8, window_bounds = array<i64: 1, 32>}, {transform_indices = @transform_9, window_bounds = array<i64: 8, 32>}]} {
    %c0 = arith.constant 0 : index
    %c0_0 = arith.constant 0 : index
    %0 = vector.load %arg1[%c0, %c0_0] : memref<8x32xf32, #tpu.memory_space<vmem>>, vector<8x32xf32>
    %c0_1 = arith.constant 0 : index
    %c0_2 = arith.constant 0 : index
    %1 = vector.load %arg2[%c0_1, %c0_2] : memref<32x16xf32, #tpu.memory_space<vmem>>, vector<32x16xf32>
    %cst = arith.constant dense<0.000000e+00> : vector<8x16xf32>
    %2 = tpu.matmul %0, %1, %cst {dimension_numbers = #tpu.dot_dimension_numbers<[1], [0], [0], [1], [0, 0, 1, 1], [], []>} : vector<8x32xf32>, vector<32x16xf32>, vector<8x16xf32> -> vector<8x16xf32>
    %c0_3 = arith.constant 0 : index
    %c0_4 = arith.constant 0 : index
    %3 = vector.load %arg3[%c0_3, %c0_4] : memref<1x16xf32, #tpu.memory_space<vmem>>, vector<1x16xf32>
    %4 = vector.broadcast %3 : vector<1x16xf32> to vector<8x16xf32>
    %5 = arith.addf %2, %4 : vector<8x16xf32>
    %cst_5 = arith.constant 0.000000e+00 : f32
    %6 = vector.broadcast %cst_5 : f32 to vector<8x16xf32>
    %7 = arith.subf %6, %5 : vector<8x16xf32>
    %8 = math.exp %7 : vector<8x16xf32>
    %cst_6 = arith.constant 1.000000e+00 : f32
    %9 = vector.broadcast %cst_6 : f32 to vector<8x16xf32>
    %10 = arith.addf %9, %8 : vector<8x16xf32>
    %11 = tpu.reciprocal %10 : vector<8x16xf32> -> vector<8x16xf32>
    %c0_7 = arith.constant 0 : index
    %c0_8 = arith.constant 0 : index
    %12 = vector.load %arg4[%c0_7, %c0_8] : memref<16x8xf32, #tpu.memory_space<vmem>>, vector<16x8xf32>
    %cst_9 = arith.constant dense<0.000000e+00> : vector<8x8xf32>
    %13 = tpu.matmul %11, %12, %cst_9 {dimension_numbers = #tpu.dot_dimension_numbers<[1], [0], [0], [1], [0, 0, 1, 1], [], []>} : vector<8x16xf32>, vector<16x8xf32>, vector<8x8xf32> -> vector<8x8xf32>
    %c0_10 = arith.constant 0 : index
    %c0_11 = arith.constant 0 : index
    %14 = vector.load %arg5[%c0_10, %c0_11] : memref<1x8xf32, #tpu.memory_space<vmem>>, vector<1x8xf32>
    %15 = vector.broadcast %14 : vector<1x8xf32> to vector<8x8xf32>
    %16 = arith.addf %13, %15 : vector<8x8xf32>
    %cst_12 = arith.constant 0.000000e+00 : f32
    %17 = vector.broadcast %cst_12 : f32 to vector<8x8xf32>
    %18 = arith.maximumf %16, %17 : vector<8x8xf32>
    %c0_13 = arith.constant 0 : index
    %c0_14 = arith.constant 0 : index
    %19 = vector.load %arg6[%c0_13, %c0_14] : memref<8x16xf32, #tpu.memory_space<vmem>>, vector<8x16xf32>
    %cst_15 = arith.constant dense<0.000000e+00> : vector<8x16xf32>
    %20 = tpu.matmul %18, %19, %cst_15 {dimension_numbers = #tpu.dot_dimension_numbers<[1], [0], [0], [1], [0, 0, 1, 1], [], []>} : vector<8x8xf32>, vector<8x16xf32>, vector<8x16xf32> -> vector<8x16xf32>
    %c0_16 = arith.constant 0 : index
    %c0_17 = arith.constant 0 : index
    %21 = vector.load %arg7[%c0_16, %c0_17] : memref<1x16xf32, #tpu.memory_space<vmem>>, vector<1x16xf32>
    %22 = vector.broadcast %21 : vector<1x16xf32> to vector<8x16xf32>
    %23 = arith.addf %20, %22 : vector<8x16xf32>
    %cst_18 = arith.constant 0.000000e+00 : f32
    %24 = vector.broadcast %cst_18 : f32 to vector<8x16xf32>
    %25 = arith.maximumf %23, %24 : vector<8x16xf32>
    %c0_19 = arith.constant 0 : index
    %c0_20 = arith.constant 0 : index
    %26 = vector.load %arg8[%c0_19, %c0_20] : memref<16x32xf32, #tpu.memory_space<vmem>>, vector<16x32xf32>
    %cst_21 = arith.constant dense<0.000000e+00> : vector<8x32xf32>
    %27 = tpu.matmul %25, %26, %cst_21 {dimension_numbers = #tpu.dot_dimension_numbers<[1], [0], [0], [1], [0, 0, 1, 1], [], []>} : vector<8x16xf32>, vector<16x32xf32>, vector<8x32xf32> -> vector<8x32xf32>
    %c0_22 = arith.constant 0 : index
    %c0_23 = arith.constant 0 : index
    %28 = vector.load %arg9[%c0_22, %c0_23] : memref<1x32xf32, #tpu.memory_space<vmem>>, vector<1x32xf32>
    %29 = vector.broadcast %28 : vector<1x32xf32> to vector<8x32xf32>
    %30 = arith.addf %27, %29 : vector<8x32xf32>
    %cst_24 = arith.constant 0.000000e+00 : f32
    %31 = vector.broadcast %cst_24 : f32 to vector<8x32xf32>
    %32 = arith.subf %31, %30 : vector<8x32xf32>
    %33 = math.exp %32 : vector<8x32xf32>
    %cst_25 = arith.constant 1.000000e+00 : f32
    %34 = vector.broadcast %cst_25 : f32 to vector<8x32xf32>
    %35 = arith.addf %34, %33 : vector<8x32xf32>
    %36 = tpu.reciprocal %35 : vector<8x32xf32> -> vector<8x32xf32>
    %c0_26 = arith.constant 0 : index
    %c0_27 = arith.constant 0 : index
    %37 = vector.load %arg10[%c0_26, %c0_27] : memref<8x32xf32, #tpu.memory_space<vmem>>, vector<8x32xf32>
    tpu.vector_store %arg10[%c0_26, %c0_27], %36 {strides = array<i32>} : memref<8x32xf32, #tpu.memory_space<vmem>>, vector<8x32xf32>,
    return
  }
  func.func @transform_0(%arg0: i32) -> (i32, i32) {
    %c0_i32 = arith.constant 0 : i32
    %c0_i32_0 = arith.constant 0 : i32
    return %arg0, %c0_i32 : i32, i32
  }
  func.func @transform_1(%arg0: i32) -> (i32, i32) {
    %c0_i32 = arith.constant 0 : i32
    %c0_i32_0 = arith.constant 0 : i32
    %c0_i32_1 = arith.constant 0 : i32
    return %c0_i32, %c0_i32_0 : i32, i32
  }
  func.func @transform_2(%arg0: i32) -> (i32, i32) {
    %c0_i32 = arith.constant 0 : i32
    %c0_i32_0 = arith.constant 0 : i32
    %c0_i32_1 = arith.constant 0 : i32
    return %c0_i32, %c0_i32_0 : i32, i32
  }
  func.func @transform_3(%arg0: i32) -> (i32, i32) {
    %c0_i32 = arith.constant 0 : i32
    %c0_i32_0 = arith.constant 0 : i32
    %c0_i32_1 = arith.constant 0 : i32
    return %c0_i32, %c0_i32_0 : i32, i32
  }
  func.func @transform_4(%arg0: i32) -> (i32, i32) {
    %c0_i32 = arith.constant 0 : i32
    %c0_i32_0 = arith.constant 0 : i32
    %c0_i32_1 = arith.constant 0 : i32
    return %c0_i32, %c0_i32_0 : i32, i32
  }
  func.func @transform_5(%arg0: i32) -> (i32, i32) {
    %c0_i32 = arith.constant 0 : i32
    %c0_i32_0 = arith.constant 0 : i32
    %c0_i32_1 = arith.constant 0 : i32
    return %c0_i32, %c0_i32_0 : i32, i32
  }
  func.func @transform_6(%arg0: i32) -> (i32, i32) {
    %c0_i32 = arith.constant 0 : i32
    %c0_i32_0 = arith.constant 0 : i32
    %c0_i32_1 = arith.constant 0 : i32
    return %c0_i32, %c0_i32_0 : i32, i32
  }
  func.func @transform_7(%arg0: i32) -> (i32, i32) {
    %c0_i32 = arith.constant 0 : i32
    %c0_i32_0 = arith.constant 0 : i32
    %c0_i32_1 = arith.constant 0 : i32
    return %c0_i32, %c0_i32_0 : i32, i32
  }
  func.func @transform_8(%arg0: i32) -> (i32, i32) {
    %c0_i32 = arith.constant 0 : i32
    %c0_i32_0 = arith.constant 0 : i32
    %c0_i32_1 = arith.constant 0 : i32
    return %c0_i32, %c0_i32_0 : i32, i32
  }
  func.func @transform_9(%arg0: i32) -> (i32, i32) {
    %c0_i32 = arith.constant 0 : i32
    %c0_i32_0 = arith.constant 0 : i32
    return %arg0, %c0_i32 : i32, i32
  }
}

</mosaic_0001>

<llo_original>
// kernel: tpu_custom_call.1
$region0: #{tpu_custom_call.1}
  #allocation0 [shape = 'u32[]', space=smem, size = 0x4, offset = 0x4, fixed_abs, tag = 'smem constant byte address 0x4 - core index']
  #allocation1 [shape = 'u32[72,128]{1,0:T(1,128)}', space=vmem, size = 0x9000, scoped, tag = 'internal scratch']
  %s0 = inlined_call_operand.vmem [shape: f32[8,32], index: 0, kind: input, shape index: {}]
  %s1 = inlined_call_operand.vmem [shape: f32[32,16], index: 1, kind: input, shape index: {}]
  %s2 = inlined_call_operand.vmem [shape: f32[1,16], index: 2, kind: input, shape index: {}]
  %s3 = inlined_call_operand.vmem [shape: f32[16,8], index: 3, kind: input, shape index: {}]
  %s4 = inlined_call_operand.vmem [shape: f32[1,8], index: 4, kind: input, shape index: {}]
  %s5 = inlined_call_operand.vmem [shape: f32[8,16], index: 5, kind: input, shape index: {}]
  %s6 = inlined_call_operand.vmem [shape: f32[1,16], index: 6, kind: input, shape index: {}]
  %s7 = inlined_call_operand.vmem [shape: f32[16,32], index: 7, kind: input, shape index: {}]
  %s8 = inlined_call_operand.vmem [shape: f32[1,32], index: 8, kind: input, shape index: {}]
  %s9 = inlined_call_operand.hbm [shape: f32[8,32], index: 9, kind: output, shape index: {}]
  %s10 = sld [smem:[#allocation0]]
  $region46: #{tpu_custom_call.1} parent=0
    _
  %s12 = ssub.s32 1, %s10
  %s13 = scalar_select 0, %s12, %s10
  $region1: #{tpu_custom_call.1} parent=0
    #allocation2 [shape = 'u8[4096]{0}', space=vmem, size = 0x1000, scoped, tag = 'output window, operand 0, single buffered']
    #allocation3 [shape = 's32[1]{0}', space=sflag, size = 0x4, scoped, tag = 'scoped memory for tpu_custom_call.1']
    %14 = vsyncpa [#allocation3], 0
    // Predicated region
    $region2: #{tpu_custom_call.1} parent=1 // pred_check
      _
    $region3: #{tpu_custom_call.1} parent=1 // pred_check_branch
      %16 = sbr.rel (0) target = $region5
    $region4: #{tpu_custom_call.1} parent=1 // pred_region
      _
    $region5: #{tpu_custom_call.1} parent=1 // pred_fallthru
      _
    // Predicated region
    $region6: #{tpu_custom_call.1} parent=1 // pred_check
      _
    $region7: #{tpu_custom_call.1} parent=1 // pred_check_branch
      %18 = sbr.rel (0) target = $region9
    $region8: #{tpu_custom_call.1} parent=1 // pred_region
      _
    $region9: #{tpu_custom_call.1} parent=1 // pred_fallthru
      _
    // Predicated region
    $region10: #{tpu_custom_call.1} parent=1 // pred_check
      _
    $region11: #{tpu_custom_call.1} parent=1 // pred_check_branch
      %20 = sbr.rel (0) target = $region13
    $region12: #{tpu_custom_call.1} parent=1 // pred_region
      _
    $region13: #{tpu_custom_call.1} parent=1 // pred_fallthru
      _
    // Predicated region
    $region14: #{tpu_custom_call.1} parent=1 // pred_check
      _
    $region15: #{tpu_custom_call.1} parent=1 // pred_check_branch
      %22 = sbr.rel (0) target = $region17
    $region16: #{tpu_custom_call.1} parent=1 // pred_region
      _
    $region17: #{tpu_custom_call.1} parent=1 // pred_fallthru
      _
    // Predicated region
    $region18: #{tpu_custom_call.1} parent=1 // pred_check
      _
    $region19: #{tpu_custom_call.1} parent=1 // pred_check_branch
      %24 = sbr.rel (0) target = $region21
    $region20: #{tpu_custom_call.1} parent=1 // pred_region
      _
    $region21: #{tpu_custom_call.1} parent=1 // pred_fallthru
      _
    // Predicated region
    $region22: #{tpu_custom_call.1} parent=1 // pred_check
      _
    $region23: #{tpu_custom_call.1} parent=1 // pred_check_branch
      %26 = sbr.rel (0) target = $region25
    $region24: #{tpu_custom_call.1} parent=1 // pred_region
      _
    $region25: #{tpu_custom_call.1} parent=1 // pred_fallthru
      _
    // Predicated region
    $region26: #{tpu_custom_call.1} parent=1 // pred_check
      _
    $region27: #{tpu_custom_call.1} parent=1 // pred_check_branch
      %28 = sbr.rel (0) target = $region29
    $region28: #{tpu_custom_call.1} parent=1 // pred_region
      _
    $region29: #{tpu_custom_call.1} parent=1 // pred_fallthru
      _
    // Predicated region
    $region30: #{tpu_custom_call.1} parent=1 // pred_check
      _
    $region31: #{tpu_custom_call.1} parent=1 // pred_check_branch
      %30 = sbr.rel (0) target = $region33
    $region32: #{tpu_custom_call.1} parent=1 // pred_region
      _
    $region33: #{tpu_custom_call.1} parent=1 // pred_fallthru
      _
    // Predicated region
    $region34: #{tpu_custom_call.1} parent=1 // pred_check
      _
    $region35: #{tpu_custom_call.1} parent=1 // pred_check_branch
      %32 = sbr.rel (0) target = $region37
    $region36: #{tpu_custom_call.1} parent=1 // pred_region
      _
    $region37: #{tpu_custom_call.1} parent=1 // pred_fallthru
      _
    %v33 = vld [vmem:[%s0] sm:$0xff]
    %v34 = vld [vmem:[%s1] sm:$0xff]
    %v35 = vld [vmem:[%s1 + $0x8] sm:$0xff]
    %v36 = vld [vmem:[%s1 + $0x10] sm:$0xff]
    %v37 = vld [vmem:[%s1 + $0x18] sm:$0xff]
    %v38 = vld [vmem:[%s2] sm:$0x1]
    %v40 = vperm.slane %v38, 0
    %vm42 = vcmask 261120
    %v44 = vsel %vm42, %v33, 0
    %46 = vmatpush.msra.mxu0 0.0
    %47 = vmatpush.msra.mxu0 0.0
    %48 = vmatpush.msra.mxu0 0.0
    %49 = vmatpush.msra.mxu0 0.0
    %50 = vmatpush.msra.mxu0 0.0
    %51 = vmatpush.msra.mxu0 0.0
    %52 = vmatpush.msra.mxu0 0.0
    %53 = vmatpush.msra.mxu0 0.0
    %54 = vmatpush.msra.mxu0 0.0
    %55 = vmatpush.msra.mxu0 0.0
    %56 = vmatpush.msra.mxu0 0.0
    %57 = vmatpush.msra.mxu0 0.0
    %58 = vmatpush.msra.mxu0 %v37
    %59 = vmatpush.msra.mxu0 %v36
    %60 = vmatpush.msra.mxu0 %v35
    %61 = vmatpush.msra.mxu0 %v34
    %62 = vmatmul.f32.gmra.mxu0 %v44
    %v63 = vpop.f32.mrf.mxu0
    %v64 = vadd.f32 %v40, %v63
    %65 = vdwg.mxu0
    %v66 = vsub.f32 0.0, %v64
    %v67 = vmul.f32 %v66, 1.442695
    %v68 = vpow.pop %v67
    %v69 = vadd.f32 %v68, 1.0
    %v70 = vrcp.pop %v69
    %v71 = vmul.f32 %v69, %v70
    %v72 = vsub.f32 1.0, %v71
    %v73 = vmul.f32 %v70, %v72
    %v74 = vadd.f32 %v70, %v73
    %vm75 = vweird.f32 %v69
    %vm76 = vweird.f32 %v70
    %vm77 = vmor %vm75, %vm76
    %v78 = vsel %vm77, %v70, %v74
    %v79 = vand.u32 2147483647, %v69
    %vm80 = vcmp.eq.f32.partialorder %v79, 8.507059e+37
    %v81 = vand.u32 %v69, 2147483648
    %v82 = vor.u32 1.1754944e-38, %v81
    %v83 = vsel %vm80, %v82, %v78
    %v84 = vld [vmem:[%s3] sm:$0xff]
    %v85 = vld [vmem:[%s3 + $0x8] sm:$0xff]
    %v86 = vld [vmem:[%s4] sm:$0x1]
    %v88 = vperm.slane %v86, 0
    %vm90 = vcmask 130048
    %v92 = vsel %vm90, %v83, 0
    %94 = vmatpush.msra.mxu0 0.0
    %95 = vmatpush.msra.mxu0 0.0
    %96 = vmatpush.msra.mxu0 0.0
    %97 = vmatpush.msra.mxu0 0.0
    %98 = vmatpush.msra.mxu0 0.0
    %99 = vmatpush.msra.mxu0 0.0
    %100 = vmatpush.msra.mxu0 0.0
    %101 = vmatpush.msra.mxu0 0.0
    %102 = vmatpush.msra.mxu0 0.0
    %103 = vmatpush.msra.mxu0 0.0
    %104 = vmatpush.msra.mxu0 0.0
    %105 = vmatpush.msra.mxu0 0.0
    %106 = vmatpush.msra.mxu0 0.0
    %107 = vmatpush.msra.mxu0 0.0
    %108 = vmatpush.msra.mxu0 %v85
    %109 = vmatpush.msra.mxu0 %v84
    %110 = vmatmul.f32.gmra.mxu0 %v92
    %v111 = vpop.f32.mrf.mxu0
    %v112 = vadd.f32 %v88, %v111
    %113 = vdwg.mxu0
    %v114 = vmax.f32 %v112, 0.0
    %v115 = vld [vmem:[%s5] sm:$0xff]
    %v116 = vld [vmem:[%s6] sm:$0x1]
    %v118 = vperm.slane %v116, 0
    %vm120 = vcmask 64512
    %v122 = vsel %vm120, %v114, 0
    %124 = vmatpush.msra.mxu0 0.0
    %125 = vmatpush.msra.mxu0 0.0
    %126 = vmatpush.msra.mxu0 0.0
    %127 = vmatpush.msra.mxu0 0.0
    %128 = vmatpush.msra.mxu0 0.0
    %129 = vmatpush.msra.mxu0 0.0
    %130 = vmatpush.msra.mxu0 0.0
    %131 = vmatpush.msra.mxu0 0.0
    %132 = vmatpush.msra.mxu0 0.0
    %133 = vmatpush.msra.mxu0 0.0
    %134 = vmatpush.msra.mxu0 0.0
    %135 = vmatpush.msra.mxu0 0.0
    %136 = vmatpush.msra.mxu0 0.0
    %137 = vmatpush.msra.mxu0 0.0
    %138 = vmatpush.msra.mxu0 0.0
    %139 = vmatpush.msra.mxu0 %v115
    %140 = vmatmul.f32.gmra.mxu0 %v122
    %v141 = vpop.f32.mrf.mxu0
    %v142 = vadd.f32 %v118, %v141
    %143 = vdwg.mxu0
    %v144 = vmax.f32 %v142, 0.0
    %v145 = vld [vmem:[%s7] sm:$0xff]
    %v146 = vld [vmem:[%s7 + $0x8] sm:$0xff]
    %v147 = vld [vmem:[%s8] sm:$0x1]
    %v149 = vperm.slane %v147, 0
    %v152 = vsel %vm90, %v144, 0
    %154 = vmatpush.msra.mxu0 0.0
    %155 = vmatpush.msra.mxu0 0.0
    %156 = vmatpush.msra.mxu0 0.0
    %157 = vmatpush.msra.mxu0 0.0
    %158 = vmatpush.msra.mxu0 0.0
    %159 = vmatpush.msra.mxu0 0.0
    %160 = vmatpush.msra.mxu0 0.0
    %161 = vmatpush.msra.mxu0 0.0
    %162 = vmatpush.msra.mxu0 0.0
    %163 = vmatpush.msra.mxu0 0.0
    %164 = vmatpush.msra.mxu0 0.0
    %165 = vmatpush.msra.mxu0 0.0
    %166 = vmatpush.msra.mxu0 0.0
    %167 = vmatpush.msra.mxu0 0.0
    %168 = vmatpush.msra.mxu0 %v146
    %169 = vmatpush.msra.mxu0 %v145
    %170 = vmatmul.f32.gmra.mxu0 %v152
    %v171 = vpop.f32.mrf.mxu0
    %v172 = vadd.f32 %v149, %v171
    %173 = vdwg.mxu0
    %v174 = vsub.f32 0.0, %v172
    %v175 = vmul.f32 %v174, 1.442695
    %v176 = vpow.pop %v175
    %v177 = vadd.f32 %v176, 1.0
    %v178 = vrcp.pop %v177
    %v179 = vmul.f32 %v177, %v178
    %v180 = vsub.f32 1.0, %v179
    %v181 = vmul.f32 %v178, %v180
    %v182 = vadd.f32 %v178, %v181
    %vm183 = vweird.f32 %v177
    %vm184 = vweird.f32 %v178
    %vm185 = vmor %vm183, %vm184
    %v186 = vsel %vm185, %v178, %v182
    %v187 = vand.u32 2147483647, %v177
    %vm188 = vcmp.eq.f32.partialorder %v187, 8.507059e+37
    %v189 = vand.u32 %v177, 2147483648
    %v190 = vor.u32 1.1754944e-38, %v189
    %v191 = vsel %vm188, %v190, %v186
    %192 = vst.msk [vmem:[#allocation2] sm:$0xff] %vm42, %v191
    // Predicated region
    $region38: #{tpu_custom_call.1} parent=1 // pred_check
      _
    $region39: #{tpu_custom_call.1} parent=1 // pred_check_branch
      %194 = sbr.rel (0) target = $region41
    $region40: #{tpu_custom_call.1} parent=1 // pred_region
      %196 = vsyncadd [#allocation3], 0
      %s198 = sshll.u32 [#allocation2], 4
      %s199 = int_to_ptr.vmem [resolvable:$true] %s198
      %s200 = sshll.u32 %s9, 4
      %s201 = int_to_ptr.hbm [resolvable:$true] %s200
      %203 = dma.vmem_to_hbm [thread:$0]  %s199, 128, %s201, [#allocation3]
    $region41: #{tpu_custom_call.1} parent=1 // pred_fallthru
      _
    // Predicated region
    $region42: #{tpu_custom_call.1} parent=1 // pred_check
      _
    $region43: #{tpu_custom_call.1} parent=1 // pred_check_branch
      %205 = sbr.rel (0) target = $region45
    $region44: #{tpu_custom_call.1} parent=1 // pred_region
      %207 = dma.done [#allocation3], 128
    $region45: #{tpu_custom_call.1} parent=1 // pred_fallthru
      _
    %208 = vsyncpa [#allocation3], 1

</llo_original>
